<compile_context>
chip_gen: v7x
topology: tpu7x:2x2x1
jax: 0.10.0
libtpu: 0.0.40
codegen_flags: <defaults>
</compile_context>

<pallas_src>
import functools

import jax
import jax.numpy as jnp
import numpy as np
from jax.experimental import pallas as pl
from jax.experimental.pallas import tpu as pltpu


# ---------------------------------------------------------------------------
# Kernels
# ---------------------------------------------------------------------------
def _gn_mod_kernel(x_ref, es_ref, eb_ref, o_ref, *, eps, inv_n):
    """Fused GroupNorm + adaptive modulation for one (batch, group-block) tile.

    x_ref : (1, gb, cpg, S_pad)   one batch row, gb groups
    es/eb : (1, gb, cpg)          effective scale / bias for this tile
    o_ref : (1, gb, cpg, S_pad)
    """
    x = x_ref[...].astype(jnp.float32)

    # Single pass: sum and sum-of-squares (lane reduce, then sublane reduce).
    row_s1 = jnp.sum(x, axis=-1, keepdims=True)
    row_s2 = jnp.sum(x * x, axis=-1, keepdims=True)
    mean = jnp.sum(row_s1, axis=-2, keepdims=True) * inv_n           # (1, gb, 1, 1)
    ex2 = jnp.sum(row_s2, axis=-2, keepdims=True) * inv_n
    var = jnp.maximum(ex2 - mean * mean, 0.0)                        # clamp cancellation
    inv = jax.lax.rsqrt(var + eps)

    es = es_ref[...][..., None]                                      # (1, gb, cpg, 1)
    eb = eb_ref[...][..., None]

    # (x - mean) * inv * es + eb  ==  x * a + (eb - mean * a)
    a = inv * es
    o_ref[...] = (x * a + (eb - mean * a)).astype(o_ref.dtype)


def _stats_kernel(x_ref, s1_ref, s2_ref):
    """Accumulate per-(b, g) sum and sum-of-squares over S-chunks.

    x_ref : (1, 1, cpg, Sc);  s1/s2 : (1, 1, 1, 1) f32 accumulators.
    """
    @pl.when(pl.program_id(2) == 0)
    def _():
        s1_ref[...] = jnp.zeros_like(s1_ref)
        s2_ref[...] = jnp.zeros_like(s2_ref)

    x = x_ref[...].astype(jnp.float32)
    s1_ref[...] += jnp.sum(jnp.sum(x, axis=-1, keepdims=True),
                           axis=-2, keepdims=True)
    s2_ref[...] += jnp.sum(jnp.sum(x * x, axis=-1, keepdims=True),
                           axis=-2, keepdims=True)


def _affine_kernel(x_ref, a_ref, b_ref, o_ref):
    """out = x * a + b per channel (second pass of the split-S path).

    x_ref/o_ref : (1, 1, cpg, Sc);  a/b : (1, 1, cpg) f32.
    """
    x = x_ref[...].astype(jnp.float32)
    a = a_ref[...][..., None]
    b = b_ref[...][..., None]
    o_ref[...] = (x * a + b).astype(o_ref.dtype)


# ---------------------------------------------------------------------------
# Wrapper
# ---------------------------------------------------------------------------
def adaptive_group_norm(x, time_emb, cond, params, *, num_groups, eps=1e-6,
                        tile_cap_bytes=None, donate_x=False):
    """Forward pass of AdaptiveGroupNorm. x: (B, C, T, H, W)."""
    B, C, T, H, W = x.shape
    G = num_groups
    cpg = C // G
    S = T * H * W
    itemsize = x.dtype.itemsize

    # --- conditioning MLPs (tiny GEMMs; deliberately left to XLA) -----------
    f32 = jnp.float32
    sb = (jax.nn.silu(time_emb.astype(f32)) @ params["wt"].astype(f32)
          + params["bt"].astype(f32)) * params["time_scale"].astype(f32)
    if cond is not None:
        sb = sb + (jax.nn.silu(cond.astype(f32)) @ params["wc"].astype(f32)
                   + params["bc"].astype(f32)) * params["cond_scale"].astype(f32)
    mod = sb[:, :C] + sb[:, C:]                                # scale + bias, (B, C)
    eff_scale = params["gamma"].astype(f32)[None, :] * mod     # (B, C)
    eff_bias = params["beta"].astype(f32)[None, :] * mod       # (B, C)

    # --- VMEM budget (generation-aware) --------------------------------------
    try:
        vmem_cap = int(pltpu.get_tpu_info().vmem_capacity_bytes)
    except Exception:
        vmem_cap = 64 << 20                                    # conservative (v7x)
    usable_vmem = max(vmem_cap - (16 << 20), 24 << 20)         # >=16 MiB headroom
    if tile_cap_bytes is None:
        # double-buffered in+out = 4*tile, plus slack: ~9.6 MiB on v7x, ~22 MiB v5e/v6e
        tile_cap_bytes = (usable_vmem - (4 << 20)) // 5
    tile_cap_bytes = int(max(tile_cap_bytes, 1))

    # --- lane-dense S: pad T*H*W up to a multiple of 128 ---------------------
    S_pad = ((S + 127) // 128) * 128
    x_r = x.reshape(B, G, cpg, S)
    if S_pad != S:
        x_r = jnp.pad(x_r, ((0, 0), (0, 0), (0, 0), (0, S_pad - S)))
    inv_n = 1.0 / (cpg * S)            # true count; zero pad adds nothing to sums

    bytes_per_group = cpg * S_pad * itemsize

    if bytes_per_group <= tile_cap_bytes:
        # ----------------------- fused single-pass path -----------------------
        gb = int(max(1, min(G, tile_cap_bytes // bytes_per_group)))
        while G % gb:                  # keep gb a divisor of G (simple, exact tiles)
            gb -= 1
        num_gb = G // gb
        tile_bytes = gb * bytes_per_group
        vmem_limit = int(min(max(4 * tile_bytes + (2 << 20), 32 << 20), usable_vmem))

        es = eff_scale.reshape(B * num_gb, gb, cpg)
        eb = eff_bias.reshape(B * num_gb, gb, cpg)

        kernel = functools.partial(_gn_mod_kernel, eps=eps, inv_n=inv_n)
        out = pl.pallas_call(
            kernel,
            out_shape=jax.ShapeDtypeStruct((B, G, cpg, S_pad), x.dtype),
            grid_spec=pltpu.PrefetchScalarGridSpec(
                num_scalar_prefetch=0,
                grid=(B, num_gb),
                in_specs=[
                    pl.BlockSpec((1, gb, cpg, S_pad), lambda b, g: (b, g, 0, 0)),
                    pl.BlockSpec((1, gb, cpg), lambda b, g: (b * num_gb + g, 0, 0)),
                    pl.BlockSpec((1, gb, cpg), lambda b, g: (b * num_gb + g, 0, 0)),
                ],
                out_specs=pl.BlockSpec((1, gb, cpg, S_pad), lambda b, g: (b, g, 0, 0)),
            ),
            input_output_aliases={0: 0} if donate_x else {},
            compiler_params=pltpu.CompilerParams(
                dimension_semantics=("parallel", "parallel"),
                vmem_limit_bytes=vmem_limit),
            cost_estimate=pl.CostEstimate(
                flops=int(10 * x_r.size), transcendentals=int(B * G),
                bytes_accessed=int(2 * x_r.size * itemsize)),
        )(x_r, es, eb)

        if S_pad != S:
            out = out[..., :S]
        return out.reshape(B, C, T, H, W)

    # --------------------- split-S two-pass fallback -------------------------
    # A single group tile exceeds the cap (e.g. large video S on v7x VMEM).
    sc = max(128, (tile_cap_bytes // (cpg * itemsize)) // 128 * 128)
    S_pad2 = ((S_pad + sc - 1) // sc) * sc
    if S_pad2 != S_pad:
        x_r = jnp.pad(x_r, ((0, 0), (0, 0), (0, 0), (0, S_pad2 - S_pad)))
    num_sc = S_pad2 // sc
    tile_bytes = cpg * sc * itemsize
    vmem_limit = int(min(max(4 * tile_bytes + (2 << 20), 32 << 20), usable_vmem))

    # Pass 1: per-(b, g) sum and sum-of-squares, accumulated across S-chunks.
    s1, s2 = pl.pallas_call(
        _stats_kernel,
        out_shape=(jax.ShapeDtypeStruct((B, G, 1, 1), jnp.float32),
                   jax.ShapeDtypeStruct((B, G, 1, 1), jnp.float32)),
        grid_spec=pltpu.PrefetchScalarGridSpec(
            num_scalar_prefetch=0,
            grid=(B, G, num_sc),
            in_specs=[pl.BlockSpec((1, 1, cpg, sc), lambda b, g, s: (b, g, 0, s))],
            out_specs=(pl.BlockSpec((1, 1, 1, 1), lambda b, g, s: (b, g, 0, 0)),
                       pl.BlockSpec((1, 1, 1, 1), lambda b, g, s: (b, g, 0, 0))),
        ),
        compiler_params=pltpu.CompilerParams(
            dimension_semantics=("parallel", "parallel", "arbitrary"),
            vmem_limit_bytes=vmem_limit),
        cost_estimate=pl.CostEstimate(
            flops=int(3 * x_r.size), transcendentals=0,
            bytes_accessed=int(x_r.size * itemsize)),
    )(x_r)

    # Tiny per-group math in plain JAX: fold mean/var into a per-channel affine.
    mean = s1.reshape(B, G) * inv_n
    var = jnp.maximum(s2.reshape(B, G) * inv_n - mean * mean, 0.0)
    inv = jax.lax.rsqrt(var + eps)                                   # (B, G)
    a = inv[:, :, None] * eff_scale.reshape(B, G, cpg)               # (B, G, cpg)
    b_ = eff_bias.reshape(B, G, cpg) - mean[:, :, None] * a
    a = a.reshape(B * G, 1, cpg)
    b_ = b_.reshape(B * G, 1, cpg)

    # Pass 2: lane-dense x * a + b sweep over the same S-chunks.
    out = pl.pallas_call(
        _affine_kernel,
        out_shape=jax.ShapeDtypeStruct((B, G, cpg, S_pad2), x.dtype),
        grid_spec=pltpu.PrefetchScalarGridSpec(
            num_scalar_prefetch=0,
            grid=(B, G, num_sc),
            in_specs=[
                pl.BlockSpec((1, 1, cpg, sc), lambda b, g, s: (b, g, 0, s)),
                pl.BlockSpec((1, 1, cpg), lambda b, g, s: (b * G + g, 0, 0)),
                pl.BlockSpec((1, 1, cpg), lambda b, g, s: (b * G + g, 0, 0)),
            ],
            out_specs=pl.BlockSpec((1, 1, cpg, sc), lambda b, g, s: (b, g, 0, s)),
        ),
        input_output_aliases={0: 0} if donate_x else {},
        compiler_params=pltpu.CompilerParams(
            dimension_semantics=("parallel", "parallel", "parallel"),
            vmem_limit_bytes=vmem_limit),
        cost_estimate=pl.CostEstimate(
            flops=int(2 * x_r.size), transcendentals=0,
            bytes_accessed=int(2 * x_r.size * itemsize)),
    )(x_r, a, b_)

    if S_pad2 != S:
        out = out[..., :S]
    return out.reshape(B, C, T, H, W)


# ---------------------------------------------------------------------------
# Pure-JAX reference (mirrors the PyTorch module).
# ---------------------------------------------------------------------------
def reference(x, time_emb, cond, params, *, num_groups, eps=1e-6):
    def silu(v):
        return v * jax.nn.sigmoid(v)

    B, C = x.shape[0], x.shape[1]
    sb = (silu(time_emb) @ params["wt"] + params["bt"]) * params["time_scale"]
    if cond is not None:
        sb = sb + (silu(cond) @ params["wc"] + params["bc"]) * params["cond_scale"]
    scale, bias = sb[:, :C], sb[:, C:]

    xr = x.reshape(B, num_groups, -1)
    mean = xr.mean(-1, keepdims=True)
    var = xr.var(-1, keepdims=True)
    xh = ((xr - mean) / jnp.sqrt(var + eps)).reshape(x.shape)
    xn = xh * params["gamma"][None, :, None, None, None] \
         + params["beta"][None, :, None, None, None]
    return xn * (scale + bias)[:, :, None, None, None]


def _make_params(key, C, time_emb_dim, cond_dim):
    ks = jax.random.split(key, 6)
    return dict(
        wt=jax.random.normal(ks[0], (time_emb_dim, 2 * C), jnp.float32) * 0.05,
        bt=jax.random.normal(ks[1], (2 * C,), jnp.float32) * 0.05,
        wc=jax.random.normal(ks[2], (cond_dim, 2 * C), jnp.float32) * 0.05,
        bc=jax.random.normal(ks[3], (2 * C,), jnp.float32) * 0.05,
        gamma=1.0 + 0.1 * jax.random.normal(ks[4], (C,), jnp.float32),
        beta=0.1 * jax.random.normal(ks[5], (C,), jnp.float32),
        time_scale=jnp.array([1.0], jnp.float32),
        cond_scale=jnp.array([1.0], jnp.float32),
    )


if __name__ == "__main__":
    key = jax.random.PRNGKey(0)
    time_emb_dim, cond_dim = 32, 16

    # ---- Test 1: fused path, S = 2*7*7 = 98 (exercises lane padding) -------
    B, C, T, H, W, G = 2, 64, 2, 7, 7, 8
    k = jax.random.split(key, 4)
    x = jax.random.normal(k[0], (B, C, T, H, W), jnp.float32)
    te = jax.random.normal(k[1], (B, time_emb_dim), jnp.float32)
    cd = jax.random.normal(k[2], (B, cond_dim), jnp.float32)
    params = _make_params(k[3], C, time_emb_dim, cond_dim)

    ref1 = jax.block_until_ready(reference(x, te, cd, params, num_groups=G))
    out1 = jax.block_until_ready(
        adaptive_group_norm(x, te, cd, params, num_groups=G))
    np.testing.assert_allclose(np.asarray(out1), np.asarray(ref1),
                               rtol=5e-5, atol=5e-5)

    # cond=None branch (same shapes -> same compiled kernel)
    ref1n = jax.block_until_ready(reference(x, te, None, params, num_groups=G))
    out1n = jax.block_until_ready(
        adaptive_group_norm(x, te, None, params, num_groups=G))
    np.testing.assert_allclose(np.asarray(out1n), np.asarray(ref1n),
                               rtol=5e-5, atol=5e-5)

    # ---- Test 2: forced split-S two-pass path (tiny tile cap) ---------------
    B2, C2, T2, H2, W2, G2 = 2, 32, 2, 16, 16, 4      # S = 512, cpg = 8
    k2 = jax.random.split(jax.random.PRNGKey(1), 4)
    x2 = jax.random.normal(k2[0], (B2, C2, T2, H2, W2), jnp.float32)
    te2 = jax.random.normal(k2[1], (B2, time_emb_dim), jnp.float32)
    cd2 = jax.random.normal(k2[2], (B2, cond_dim), jnp.float32)
    params2 = _make_params(k2[3], C2, time_emb_dim, cond_dim)

    ref2 = jax.block_until_ready(reference(x2, te2, cd2, params2, num_groups=G2))
    out2 = jax.block_until_ready(
        adaptive_group_norm(x2, te2, cd2, params2, num_groups=G2,
                            tile_cap_bytes=8 * 256 * 4))   # forces sc=256, 2 chunks
    np.testing.assert_allclose(np.asarray(out2), np.asarray(ref2),
                               rtol=5e-5, atol=5e-5)

    print("KERNEL_OK")
</pallas_src>

<mosaic_0001>
module attributes {stable_mosaic.version = 11 : i64} {
  func.func @_gn_mod_kernel(%arg0: i32, %arg1: i32, %arg2: memref<1x8x8x128xf32, #tpu.memory_space<vmem>>, %arg3: memref<1x8x8xf32, #tpu.memory_space<vmem>>, %arg4: memref<1x8x8xf32, #tpu.memory_space<vmem>>, %arg5: memref<1x8x8x128xf32, #tpu.memory_space<vmem>>) attributes {dimension_semantics = [#tpu.dimension_semantics<parallel>, #tpu.dimension_semantics<parallel>], iteration_bounds = array<i64: 2, 1>, scalar_prefetch = 0 : i64, scratch_operands = 0 : i64, tpu.core_type = #tpu.core_type<tc>, window_params = [{transform_indices = @transform_0, window_bounds = array<i64: 1, 8, 8, 128>}, {transform_indices = @transform_1, window_bounds = array<i64: 1, 8, 8>}, {transform_indices = @transform_2, window_bounds = array<i64: 1, 8, 8>}, {transform_indices = @transform_3, window_bounds = array<i64: 1, 8, 8, 128>}]} {
    %c0 = arith.constant 0 : index
    %c0_0 = arith.constant 0 : index
    %c0_1 = arith.constant 0 : index
    %c0_2 = arith.constant 0 : index
    %0 = vector.load %arg2[%c0, %c0_0, %c0_1, %c0_2] : memref<1x8x8x128xf32, #tpu.memory_space<vmem>>, vector<1x8x8x128xf32>
    %cst = arith.constant dense<0.000000e+00> : vector<1x8x8xf32>
    %1 = vector.multi_reduction <add>, %0, %cst [3] : vector<1x8x8x128xf32> to vector<1x8x8xf32>
    %2 = vector.shape_cast %1 : vector<1x8x8xf32> to vector<1x8x8x1xf32>
    %3 = arith.mulf %0, %0 : vector<1x8x8x128xf32>
    %cst_3 = arith.constant dense<0.000000e+00> : vector<1x8x8xf32>
    %4 = vector.multi_reduction <add>, %3, %cst_3 [3] : vector<1x8x8x128xf32> to vector<1x8x8xf32>
    %5 = vector.shape_cast %4 : vector<1x8x8xf32> to vector<1x8x8x1xf32>
    %cst_4 = arith.constant dense<0.000000e+00> : vector<1x8x1xf32>
    %6 = vector.multi_reduction <add>, %2, %cst_4 [2] : vector<1x8x8x1xf32> to vector<1x8x1xf32>
    %7 = vector.shape_cast %6 : vector<1x8x1xf32> to vector<1x8x1x1xf32>
    %cst_5 = arith.constant 0.00127551018 : f32
    %8 = vector.broadcast %cst_5 : f32 to vector<1x8x1x1xf32>
    %9 = arith.mulf %7, %8 : vector<1x8x1x1xf32>
    %cst_6 = arith.constant dense<0.000000e+00> : vector<1x8x1xf32>
    %10 = vector.multi_reduction <add>, %5, %cst_6 [2] : vector<1x8x8x1xf32> to vector<1x8x1xf32>
    %11 = vector.shape_cast %10 : vector<1x8x1xf32> to vector<1x8x1x1xf32>
    %cst_7 = arith.constant 0.00127551018 : f32
    %12 = vector.broadcast %cst_7 : f32 to vector<1x8x1x1xf32>
    %13 = arith.mulf %11, %12 : vector<1x8x1x1xf32>
    %14 = arith.mulf %9, %9 : vector<1x8x1x1xf32>
    %15 = arith.subf %13, %14 : vector<1x8x1x1xf32>
    %cst_8 = arith.constant 0.000000e+00 : f32
    %16 = vector.broadcast %cst_8 : f32 to vector<1x8x1x1xf32>
    %17 = arith.maximumf %15, %16 : vector<1x8x1x1xf32>
    %cst_9 = arith.constant 9.99999997E-7 : f32
    %18 = vector.broadcast %cst_9 : f32 to vector<1x8x1x1xf32>
    %19 = arith.addf %17, %18 : vector<1x8x1x1xf32>
    %20 = math.rsqrt %19 : vector<1x8x1x1xf32>
    %c0_10 = arith.constant 0 : index
    %c0_11 = arith.constant 0 : index
    %c0_12 = arith.constant 0 : index
    %21 = vector.load %arg3[%c0_10, %c0_11, %c0_12] : memref<1x8x8xf32, #tpu.memory_space<vmem>>, vector<1x8x8xf32>
    %22 = vector.shape_cast %21 : vector<1x8x8xf32> to vector<1x8x8x1xf32>
    %c0_13 = arith.constant 0 : index
    %c0_14 = arith.constant 0 : index
    %c0_15 = arith.constant 0 : index
    %23 = vector.load %arg4[%c0_13, %c0_14, %c0_15] : memref<1x8x8xf32, #tpu.memory_space<vmem>>, vector<1x8x8xf32>
    %24 = vector.shape_cast %23 : vector<1x8x8xf32> to vector<1x8x8x1xf32>
    %25 = vector.broadcast %20 : vector<1x8x1x1xf32> to vector<1x8x8x1xf32>
    %26 = arith.mulf %25, %22 : vector<1x8x8x1xf32>
    %27 = vector.broadcast %26 : vector<1x8x8x1xf32> to vector<1x8x8x128xf32>
    %28 = arith.mulf %0, %27 : vector<1x8x8x128xf32>
    %29 = vector.broadcast %9 : vector<1x8x1x1xf32> to vector<1x8x8x1xf32>
    %30 = arith.mulf %29, %26 : vector<1x8x8x1xf32>
    %31 = arith.subf %24, %30 : vector<1x8x8x1xf32>
    %32 = vector.broadcast %31 : vector<1x8x8x1xf32> to vector<1x8x8x128xf32>
    %33 = arith.addf %28, %32 : vector<1x8x8x128xf32>
    %c0_16 = arith.constant 0 : index
    %c0_17 = arith.constant 0 : index
    %c0_18 = arith.constant 0 : index
    %c0_19 = arith.constant 0 : index
    %34 = vector.load %arg5[%c0_16, %c0_17, %c0_18, %c0_19] : memref<1x8x8x128xf32, #tpu.memory_space<vmem>>, vector<1x8x8x128xf32>
    tpu.vector_store %arg5[%c0_16, %c0_17, %c0_18, %c0_19], %33 {strides = array<i32>} : memref<1x8x8x128xf32, #tpu.memory_space<vmem>>, vector<1x8x8x128xf32>,
    return
  }
  func.func @transform_0(%arg0: i32, %arg1: i32) -> (i32, i32, i32, i32) {
    %c0_i32 = arith.constant 0 : i32
    %c0_i32_0 = arith.constant 0 : i32
    %c0_i32_1 = arith.constant 0 : i32
    return %arg0, %arg1, %c0_i32, %c0_i32_0 : i32, i32, i32, i32
  }
  func.func @transform_1(%arg0: i32, %arg1: i32) -> (i32, i32, i32) {
    %c1_i32 = arith.constant 1 : i32
    %0 = arith.muli %arg0, %c1_i32 : i32
    %1 = arith.addi %0, %arg1 : i32
    %c0_i32 = arith.constant 0 : i32
    %c0_i32_0 = arith.constant 0 : i32
    %c0_i32_1 = arith.constant 0 : i32
    return %1, %c0_i32, %c0_i32_0 : i32, i32, i32
  }
  func.func @transform_2(%arg0: i32, %arg1: i32) -> (i32, i32, i32) {
    %c1_i32 = arith.constant 1 : i32
    %0 = arith.muli %arg0, %c1_i32 : i32
    %1 = arith.addi %0, %arg1 : i32
    %c0_i32 = arith.constant 0 : i32
    %c0_i32_0 = arith.constant 0 : i32
    %c0_i32_1 = arith.constant 0 : i32
    return %1, %c0_i32, %c0_i32_0 : i32, i32, i32
  }
  func.func @transform_3(%arg0: i32, %arg1: i32) -> (i32, i32, i32, i32) {
    %c0_i32 = arith.constant 0 : i32
    %c0_i32_0 = arith.constant 0 : i32
    %c0_i32_1 = arith.constant 0 : i32
    return %arg0, %arg1, %c0_i32, %c0_i32_0 : i32, i32, i32, i32
  }
}

</mosaic_0001>

<llo_original>
// kernel: tpu_custom_call.1
$region0: #{tpu_custom_call.1}
  #allocation0 [shape = 'u32[]', space=smem, size = 0x4, offset = 0x4, fixed_abs, tag = 'smem constant byte address 0x4 - core index']
  #allocation1 [shape = 'u32[144,128]{1,0:T(1,128)}', space=vmem, size = 0x12000, scoped, tag = 'internal scratch']
  %s0 = inlined_call_operand.hbm [shape: f32[2,8,8,128], index: 0, kind: input, shape index: {}]
  %s1 = inlined_call_operand.hbm [shape: f32[2,8,8], index: 1, kind: input, shape index: {}]
  %s2 = inlined_call_operand.hbm [shape: f32[2,8,8], index: 2, kind: input, shape index: {}]
  %s3 = inlined_call_operand.hbm [shape: f32[2,8,8,128], index: 3, kind: output, shape index: {}]
  %s4 = sld [smem:[#allocation0]]
  $region57: #{tpu_custom_call.1} parent=0
    _
  %s6 = ssub.s32 1, %s4
  %s7 = scalar_select 0, %s6, %s4
  $region1: #{tpu_custom_call.1} parent=0
    #allocation2 [shape = 'u8[65536]{0}', space=vmem, size = 0x10000, scoped, tag = 'input window, operand 0']
    #allocation3 [shape = 's32[2]{0}', space=sflag, size = 0x8, scoped, tag = 'scoped memory for tpu_custom_call.1']
    #allocation4 [shape = 's32[2]{0}', space=sflag, size = 0x8, scoped, tag = 'scoped memory for tpu_custom_call.1']
    #allocation5 [shape = 'u8[8192]{0}', space=vmem, size = 0x2000, scoped, tag = 'input window, operand 1']
    #allocation6 [shape = 's32[2]{0}', space=sflag, size = 0x8, scoped, tag = 'scoped memory for tpu_custom_call.1']
    #allocation7 [shape = 'u8[8192]{0}', space=vmem, size = 0x2000, scoped, tag = 'input window, operand 2']
    #allocation8 [shape = 'u8[65536]{0}', space=vmem, size = 0x10000, scoped, tag = 'output window, operand 0']
    %8 = vsyncpa [#allocation3], 0
    %s9 = scalar_lea.sflag [#allocation3], 1
    %10 = vsyncpa %s9, 0
    %11 = vsyncpa [#allocation6], 0
    %s12 = scalar_lea.sflag [#allocation6], 1
    %13 = vsyncpa %s12, 0
    %14 = vsyncpa [#allocation4], 0
    %s15 = scalar_lea.sflag [#allocation4], 1
    %16 = vsyncpa %s15, 0
    loop: start=0, step=1, limit=4
    $region2: #{tpu_custom_call.1} parent=1 // loop_pre_header
      _
    $region3: #{tpu_custom_call.1} parent=1 // loop_header
      %s18 = sphi 0, %s22
      %p19 = scmp.ge.s32.totalorder %s18, 4
      %s25 = sphi 0, %s37
      %s26 = sphi 0, %s33
      %s27 = sphi 0, %s25
      %s28 = sphi 0, %s26
      %s29 = sphi 0, %s27
      %s30 = sphi 0, %s28
      %s42 = sphi 0, %s44
      %s45 = sphi 0, %s42
      %s46 = sphi 0, %s45
      %s62 = sphi 0, %s46
      %s70 = sphi 0, %s72
      %s73 = sphi 0, %s70
      %s74 = sphi 0, %s73
      %s90 = sphi 0, %s74
      %s98 = sphi 0, %s100
      %s101 = sphi 0, %s98
      %s102 = sphi 0, %s101
      %s118 = sphi 0, %s102
      %s126 = sphi 0, %s128
      %s129 = sphi 0, %s126
      %s130 = sphi 0, %s129
      %s146 = sphi 0, %s130
    $region4: #{tpu_custom_call.1} parent=1 // loop_header_branch
      %21 = sbr.rel (%p19) target = $region8
    $region5: #{tpu_custom_call.1} parent=1 // loop_body
      %s23 = ssub.s32 %s18, 1
      %s24 = ssub.s32 %s18, 2
      %s31 = sadd.s32 1, %s26
      %p32 = scmp.ge.s32.totalorder %s31, 1
      %s33 = scalar_select %p32, 0, %s31
      %s34 = sadd.s32 1, %s25
      %s35 = scalar_select %p32, %s34, %s25
      %p36 = scmp.ge.s32.totalorder %s35, 2
      %s37 = scalar_select %p36, 0, %s35
      %s38 = ssub.s32 %s25, %s37
      %s39 = ssub.s32 %s26, %s33
      %s40 = sor.u32 %s38, %s39
      %p41 = scmp.eq.s32.totalorder %s40, 0
      %s43 = sadd.s32 %s42, 1
      %s44 = scalar_select %p41, %s42, %s43
      %p47 = pneg %p41
      %p48 = scmp.eq.s32.totalorder %s18, 1
      %p49 = por %p47, %p48
      %p50 = scmp.ne.s32.totalorder %s42, %s45
      %p51 = scmp.eq.s32.totalorder %s18, 0
      %p52 = por %p50, %p51
      %p53 = scmp.ne.s32.totalorder %s42, %s45
      %p54 = scmp.eq.s32.totalorder %s23, 1
      %p55 = por %p53, %p54
      %p56 = scmp.ne.s32.totalorder %s45, %s46
      %p57 = scmp.eq.s32.totalorder %s23, 0
      %p58 = por %p56, %p57
      %p59 = scmp.ne.s32.totalorder %s45, %s46
      %p60 = scmp.eq.s32.totalorder %s24, 1
      %p61 = por %p59, %p60
      %p63 = scmp.ne.s32.totalorder %s46, %s62
      %p64 = scmp.eq.s32.totalorder %s24, 0
      %p65 = por %p63, %p64
      %s66 = sadd.s32 %s25, %s26
      %s67 = sadd.s32 %s37, %s33
      %s68 = ssub.s32 %s66, %s67
      %p69 = scmp.eq.s32.totalorder %s68, 0
      %s71 = sadd.s32 %s70, 1
      %s72 = scalar_select %p69, %s70, %s71
      %p75 = pneg %p69
      %p76 = scmp.eq.s32.totalorder %s18, 1
      %p77 = por %p75, %p76
      %p78 = scmp.ne.s32.totalorder %s70, %s73
      %p79 = scmp.eq.s32.totalorder %s18, 0
      %p80 = por %p78, %p79
      %p81 = scmp.ne.s32.totalorder %s70, %s73
      %p82 = scmp.eq.s32.totalorder %s23, 1
      %p83 = por %p81, %p82
      %p84 = scmp.ne.s32.totalorder %s73, %s74
      %p85 = scmp.eq.s32.totalorder %s23, 0
      %p86 = por %p84, %p85
      %p87 = scmp.ne.s32.totalorder %s73, %s74
      %p88 = scmp.eq.s32.totalorder %s24, 1
      %p89 = por %p87, %p88
      %p91 = scmp.ne.s32.totalorder %s74, %s90
      %p92 = scmp.eq.s32.totalorder %s24, 0
      %p93 = por %p91, %p92
      %s94 = sadd.s32 %s25, %s26
      %s95 = sadd.s32 %s37, %s33
      %s96 = ssub.s32 %s94, %s95
      %p97 = scmp.eq.s32.totalorder %s96, 0
      %s99 = sadd.s32 %s98, 1
      %s100 = scalar_select %p97, %s98, %s99
      %p103 = pneg %p97
      %p104 = scmp.eq.s32.totalorder %s18, 1
      %p105 = por %p103, %p104
      %p106 = scmp.ne.s32.totalorder %s98, %s101
      %p107 = scmp.eq.s32.totalorder %s18, 0
      %p108 = por %p106, %p107
      %p109 = scmp.ne.s32.totalorder %s98, %s101
      %p110 = scmp.eq.s32.totalorder %s23, 1
      %p111 = por %p109, %p110
      %p112 = scmp.ne.s32.totalorder %s101, %s102
      %p113 = scmp.eq.s32.totalorder %s23, 0
      %p114 = por %p112, %p113
      %p115 = scmp.ne.s32.totalorder %s101, %s102
      %p116 = scmp.eq.s32.totalorder %s24, 1
      %p117 = por %p115, %p116
      %p119 = scmp.ne.s32.totalorder %s102, %s118
      %p120 = scmp.eq.s32.totalorder %s24, 0
      %p121 = por %p119, %p120
      %s122 = ssub.s32 %s25, %s37
      %s123 = ssub.s32 %s26, %s33
      %s124 = sor.u32 %s122, %s123
      %p125 = scmp.eq.s32.totalorder %s124, 0
      %s127 = sadd.s32 %s126, 1
      %s128 = scalar_select %p125, %s126, %s127
      %p131 = pneg %p125
      %p132 = scmp.eq.s32.totalorder %s18, 1
      %p133 = por %p131, %p132
      %p134 = scmp.ne.s32.totalorder %s126, %s129
      %p135 = scmp.eq.s32.totalorder %s18, 0
      %p136 = por %p134, %p135
      %p137 = scmp.ne.s32.totalorder %s126, %s129
      %p138 = scmp.eq.s32.totalorder %s23, 1
      %p139 = por %p137, %p138
      %p140 = scmp.ne.s32.totalorder %s129, %s130
      %p141 = scmp.eq.s32.totalorder %s23, 0
      %p142 = por %p140, %p141
      %p143 = scmp.ne.s32.totalorder %s129, %s130
      %p144 = scmp.eq.s32.totalorder %s24, 1
      %p145 = por %p143, %p144
      %p147 = scmp.ne.s32.totalorder %s130, %s146
      %p148 = scmp.eq.s32.totalorder %s24, 0
      %p149 = por %p147, %p148
      %p150 = scmp.le.s32.totalorder 1, %s18
      %p151 = scmp.lt.s32.totalorder %s18, 3
      %p152 = pnand %p150, %p151
      %p153 = pneg %p152
      // Predicated region
      $region9: #{tpu_custom_call.1} parent=5 // pred_check
        _
      $region10: #{tpu_custom_call.1} parent=5 // pred_check_branch
        %155 = sbr.rel (%p152) target = $region12
      $region11: #{tpu_custom_call.1} parent=5 // pred_region
        %s156 = ssub.s32 %s18, 1
      $region12: #{tpu_custom_call.1} parent=5 // pred_fallthru
        _
      %p157 = scmp.lt.s32.totalorder %s18, 2
      // Predicated region
      $region13: #{tpu_custom_call.1} parent=5 // pred_check
        %p158 = pneg %p157
      $region14: #{tpu_custom_call.1} parent=5 // pred_check_branch
        %160 = sbr.rel (%p158) target = $region16
      $region15: #{tpu_custom_call.1} parent=5 // pred_region
        // Predicated region
        $region17: #{tpu_custom_call.1} parent=15 // pred_check
          %p161 = pneg %p52
        $region18: #{tpu_custom_call.1} parent=15 // pred_check_branch
          %163 = sbr.rel (%p161) target = $region20
        $region19: #{tpu_custom_call.1} parent=15 // pred_region
          %s164 = sand.u32 %s42, 1
          %s165 = scalar_lea.sflag [#allocation3], %s164
          %s166 = sand.u32 %s42, 1
          %s167 = smul.addr %s166, 64
          %s168 = scalar_lea.vmem [#allocation2], %s167
          %s169 = smul.u32 8, %s26
          %s171 = ssub.s32 1024, 1024
          %172 = vsyncadd %s165, %s171
          %s173 = smul.addr %s25, 8
          %s174 = sadd.s32 %s169, %s173
          %s175 = smul.addr %s174, 128
          %s176 = scalar_lea.hbm %s0, %s175
          %s177 = sshll.u32 %s168, 4
          %s178 = int_to_ptr.vmem [resolvable:$true] %s177
          %183 = dma.hbm_to_vmem [thread:$0]  %s176, 1024, %s178, %s165, 128, 128, 8
        $region20: #{tpu_custom_call.1} parent=15 // pred_fallthru
          _
        // Predicated region
        $region21: #{tpu_custom_call.1} parent=15 // pred_check
          %p184 = pneg %p80
        $region22: #{tpu_custom_call.1} parent=15 // pred_check_branch
          %186 = sbr.rel (%p184) target = $region24
        $region23: #{tpu_custom_call.1} parent=15 // pred_region
          %s187 = sand.u32 %s18, 1
          %s188 = scalar_lea.sflag [#allocation6], %s187
          %s189 = sand.u32 %s70, 1
          %s190 = smul.addr %s189, 8
          %s191 = scalar_lea.vmem [#allocation5], %s190
          %s192 = sadd.s32 %s25, %s26
          %s194 = ssub.s32 128, 128
          %195 = vsyncadd %s188, %s194
          %s196 = smul.addr %s192, 128
          %s197 = scalar_lea.hbm %s1, %s196
          %s199 = sshll.u32 %s191, 4
          %s200 = int_to_ptr.vmem [resolvable:$true] %s199
          %202 = dma.hbm_to_vmem [thread:$0]  %s197, 128, %s200, %s188
        $region24: #{tpu_custom_call.1} parent=15 // pred_fallthru
          _
        // Predicated region
        $region25: #{tpu_custom_call.1} parent=15 // pred_check
          %p203 = pneg %p108
        $region26: #{tpu_custom_call.1} parent=15 // pred_check_branch
          %205 = sbr.rel (%p203) target = $region28
        $region27: #{tpu_custom_call.1} parent=15 // pred_region
          %s206 = sand.u32 %s18, 1
          %s207 = scalar_lea.sflag [#allocation6], %s206
          %s208 = sand.u32 %s98, 1
          %s209 = smul.addr %s208, 8
          %s210 = scalar_lea.vmem [#allocation7], %s209
          %s211 = sadd.s32 %s25, %s26
          %s213 = ssub.s32 128, 128
          %214 = vsyncadd %s207, %s213
          %s215 = smul.addr %s211, 128
          %s216 = scalar_lea.hbm %s2, %s215
          %s218 = sshll.u32 %s210, 4
          %s219 = int_to_ptr.vmem [resolvable:$true] %s218
          %221 = dma.hbm_to_vmem [thread:$0]  %s216, 128, %s219, %s207
        $region28: #{tpu_custom_call.1} parent=15 // pred_fallthru
          _
      $region16: #{tpu_custom_call.1} parent=5 // pred_fallthru
        _
      %p222 = scmp.le.s32.totalorder 1, %s18
      %p223 = scmp.lt.s32.totalorder %s18, 3
      %p224 = pnand %p222, %p223
      %p225 = pneg %p224
      // Predicated region
      $region29: #{tpu_custom_call.1} parent=5 // pred_check
        _
      $region30: #{tpu_custom_call.1} parent=5 // pred_check_branch
        %227 = sbr.rel (%p224) target = $region32
      $region31: #{tpu_custom_call.1} parent=5 // pred_region
        %s228 = ssub.s32 %s18, 1
        %s229 = sand.u32 %s45, 1
        %s230 = scalar_lea.sflag [#allocation3], %s229
        %s231 = sand.u32 %s45, 1
        %s232 = smul.addr %s231, 64
        %s233 = scalar_lea.vmem [#allocation2], %s232
        // Predicated region
        $region33: #{tpu_custom_call.1} parent=31 // pred_check
          %p234 = pneg %p58
        $region34: #{tpu_custom_call.1} parent=31 // pred_check_branch
          %236 = sbr.rel (%p234) target = $region36
        $region35: #{tpu_custom_call.1} parent=31 // pred_region
          %237 = dma.done %s230, 1024
        $region36: #{tpu_custom_call.1} parent=31 // pred_fallthru
          _
        %s238 = sand.u32 %s23, 1
        %s239 = scalar_lea.sflag [#allocation6], %s238
        %s240 = sand.u32 %s73, 1
        %s241 = smul.addr %s240, 8
        %s242 = scalar_lea.vmem [#allocation5], %s241
        // Predicated region
        $region37: #{tpu_custom_call.1} parent=31 // pred_check
          %p243 = pneg %p86
        $region38: #{tpu_custom_call.1} parent=31 // pred_check_branch
          %245 = sbr.rel (%p243) target = $region40
        $region39: #{tpu_custom_call.1} parent=31 // pred_region
          %246 = dma.done %s239, 128
        $region40: #{tpu_custom_call.1} parent=31 // pred_fallthru
          _
        %s247 = sand.u32 %s23, 1
        %s248 = scalar_lea.sflag [#allocation6], %s247
        %s249 = sand.u32 %s101, 1
        %s250 = smul.addr %s249, 8
        %s251 = scalar_lea.vmem [#allocation7], %s250
        // Predicated region
        $region41: #{tpu_custom_call.1} parent=31 // pred_check
          %p252 = pneg %p114
        $region42: #{tpu_custom_call.1} parent=31 // pred_check_branch
          %254 = sbr.rel (%p252) target = $region44
        $region43: #{tpu_custom_call.1} parent=31 // pred_region
          %255 = dma.done %s248, 128
        $region44: #{tpu_custom_call.1} parent=31 // pred_fallthru
          _
        %s256 = sand.u32 %s45, 1
        %s257 = scalar_lea.sflag [#allocation3], %s256
        %s258 = sand.u32 %s45, 1
        %s259 = smul.addr %s258, 64
        %s260 = scalar_lea.vmem [#allocation2], %s259
        %p261 = pneg %p58
        %p262 = pneg %p55
        %s263 = sand.u32 %s23, 1
        %s264 = scalar_lea.sflag [#allocation6], %s263
        %s265 = sand.u32 %s73, 1
        %s266 = smul.addr %s265, 8
        %s267 = scalar_lea.vmem [#allocation5], %s266
        %p268 = pneg %p86
        %p269 = pneg %p83
        %s270 = sand.u32 %s23, 1
        %s271 = scalar_lea.sflag [#allocation6], %s270
        %s272 = sand.u32 %s101, 1
        %s273 = smul.addr %s272, 8
        %s274 = scalar_lea.vmem [#allocation7], %s273
        %p275 = pneg %p114
        %p276 = pneg %p111
        %p277 = pneg %p142
        %p278 = pneg %p139
        %s279 = sand.u32 %s129, 1
        %s280 = scalar_lea.sflag [#allocation4], %s279
        %s281 = sand.u32 %s129, 1
        %s282 = smul.addr %s281, 64
        %s283 = scalar_lea.vmem [#allocation8], %s282
        %s284 = smul.u32 8, %s28
        %s285 = sadd.s32 %s27, %s28
        %s286 = sadd.s32 %s27, %s28
        %s287 = smul.u32 8, %s28
        %v288 = vld [vmem:[%s233] sm:$0xff]
        %v289 = vld [vmem:[%s233 + $0x8] sm:$0xff]
        %v290 = vld [vmem:[%s233 + $0x10] sm:$0xff]
        %v291 = vld [vmem:[%s233 + $0x18] sm:$0xff]
        %v292 = vld [vmem:[%s233 + $0x20] sm:$0xff]
        %v293 = vld [vmem:[%s233 + $0x28] sm:$0xff]
        %v294 = vld [vmem:[%s233 + $0x30] sm:$0xff]
        %v295 = vld [vmem:[%s233 + $0x38] sm:$0xff]
        %296 = vadd.xlane.f32.xlu0 %v288
        %v297 = vpop.xlane.xlu0 %296
        %298 = vadd.xlane.f32.xlu0 %v289
        %v299 = vpop.xlane.xlu0 %298
        %300 = vadd.xlane.f32.xlu0 %v290
        %v301 = vpop.xlane.xlu0 %300
        %302 = vadd.xlane.f32.xlu0 %v291
        %v303 = vpop.xlane.xlu0 %302
        %304 = vadd.xlane.f32.xlu0 %v292
        %v305 = vpop.xlane.xlu0 %304
        %306 = vadd.xlane.f32.xlu0 %v293
        %v307 = vpop.xlane.xlu0 %306
        %308 = vadd.xlane.f32.xlu0 %v294
        %v309 = vpop.xlane.xlu0 %308
        %310 = vadd.xlane.f32.xlu0 %v295
        %v311 = vpop.xlane.xlu0 %310
        %v312 = vmul.f32 %v288, %v288
        %v313 = vmul.f32 %v289, %v289
        %v314 = vmul.f32 %v290, %v290
        %v315 = vmul.f32 %v291, %v291
        %v316 = vmul.f32 %v292, %v292
        %v317 = vmul.f32 %v293, %v293
        %v318 = vmul.f32 %v294, %v294
        %v319 = vmul.f32 %v295, %v295
        %320 = vadd.xlane.f32.xlu0 %v312
        %v321 = vpop.xlane.xlu0 %320
        %322 = vadd.xlane.f32.xlu0 %v313
        %v323 = vpop.xlane.xlu0 %322
        %324 = vadd.xlane.f32.xlu0 %v314
        %v325 = vpop.xlane.xlu0 %324
        %326 = vadd.xlane.f32.xlu0 %v315
        %v327 = vpop.xlane.xlu0 %326
        %328 = vadd.xlane.f32.xlu0 %v316
        %v329 = vpop.xlane.xlu0 %328
        %330 = vadd.xlane.f32.xlu0 %v317
        %v331 = vpop.xlane.xlu0 %330
        %332 = vadd.xlane.f32.xlu0 %v318
        %v333 = vpop.xlane.xlu0 %332
        %334 = vadd.xlane.f32.xlu0 %v319
        %v335 = vpop.xlane.xlu0 %334
        %v336 = vrot.slane %v297, 4
        %v337 = vadd.f32 %v297, %v336
        %v338 = vrot.slane %v337, 2
        %v339 = vadd.f32 %v337, %v338
        %v340 = vrot.slane %v339, 1
        %v341 = vadd.f32 %v339, %v340
        %v342 = vrot.slane %v299, 4
        %v343 = vadd.f32 %v299, %v342
        %v344 = vrot.slane %v343, 2
        %v345 = vadd.f32 %v343, %v344
        %v346 = vrot.slane %v345, 1
        %v347 = vadd.f32 %v345, %v346
        %v348 = vrot.slane %v301, 4
        %v349 = vadd.f32 %v301, %v348
        %v350 = vrot.slane %v349, 2
        %v351 = vadd.f32 %v349, %v350
        %v352 = vrot.slane %v351, 1
        %v353 = vadd.f32 %v351, %v352
        %v354 = vrot.slane %v303, 4
        %v355 = vadd.f32 %v303, %v354
        %v356 = vrot.slane %v355, 2
        %v357 = vadd.f32 %v355, %v356
        %v358 = vrot.slane %v357, 1
        %v359 = vadd.f32 %v357, %v358
        %v360 = vrot.slane %v305, 4
        %v361 = vadd.f32 %v305, %v360
        %v362 = vrot.slane %v361, 2
        %v363 = vadd.f32 %v361, %v362
        %v364 = vrot.slane %v363, 1
        %v365 = vadd.f32 %v363, %v364
        %v366 = vrot.slane %v307, 4
        %v367 = vadd.f32 %v307, %v366
        %v368 = vrot.slane %v367, 2
        %v369 = vadd.f32 %v367, %v368
        %v370 = vrot.slane %v369, 1
        %v371 = vadd.f32 %v369, %v370
        %v372 = vrot.slane %v309, 4
        %v373 = vadd.f32 %v309, %v372
        %v374 = vrot.slane %v373, 2
        %v375 = vadd.f32 %v373, %v374
        %v376 = vrot.slane %v375, 1
        %v377 = vadd.f32 %v375, %v376
        %v378 = vrot.slane %v311, 4
        %v379 = vadd.f32 %v311, %v378
        %v380 = vrot.slane %v379, 2
        %v381 = vadd.f32 %v379, %v380
        %v382 = vrot.slane %v381, 1
        %v383 = vadd.f32 %v381, %v382
        %v384 = vmul.f32 %v341, 0.0012755102
        %v385 = vmul.f32 %v347, 0.0012755102
        %v386 = vmul.f32 %v353, 0.0012755102
        %v387 = vmul.f32 %v359, 0.0012755102
        %v388 = vmul.f32 %v365, 0.0012755102
        %v389 = vmul.f32 %v371, 0.0012755102
        %v390 = vmul.f32 %v377, 0.0012755102
        %v391 = vmul.f32 %v383, 0.0012755102
        %v392 = vrot.slane %v321, 4
        %v393 = vadd.f32 %v321, %v392
        %v394 = vrot.slane %v393, 2
        %v395 = vadd.f32 %v393, %v394
        %v396 = vrot.slane %v395, 1
        %v397 = vadd.f32 %v395, %v396
        %v398 = vrot.slane %v323, 4
        %v399 = vadd.f32 %v323, %v398
        %v400 = vrot.slane %v399, 2
        %v401 = vadd.f32 %v399, %v400
        %v402 = vrot.slane %v401, 1
        %v403 = vadd.f32 %v401, %v402
        %v404 = vrot.slane %v325, 4
        %v405 = vadd.f32 %v325, %v404
        %v406 = vrot.slane %v405, 2
        %v407 = vadd.f32 %v405, %v406
        %v408 = vrot.slane %v407, 1
        %v409 = vadd.f32 %v407, %v408
        %v410 = vrot.slane %v327, 4
        %v411 = vadd.f32 %v327, %v410
        %v412 = vrot.slane %v411, 2
        %v413 = vadd.f32 %v411, %v412
        %v414 = vrot.slane %v413, 1
        %v415 = vadd.f32 %v413, %v414
        %v416 = vrot.slane %v329, 4
        %v417 = vadd.f32 %v329, %v416
        %v418 = vrot.slane %v417, 2
        %v419 = vadd.f32 %v417, %v418
        %v420 = vrot.slane %v419, 1
        %v421 = vadd.f32 %v419, %v420
        %v422 = vrot.slane %v331, 4
        %v423 = vadd.f32 %v331, %v422
        %v424 = vrot.slane %v423, 2
        %v425 = vadd.f32 %v423, %v424
        %v426 = vrot.slane %v425, 1
        %v427 = vadd.f32 %v425, %v426
        %v428 = vrot.slane %v333, 4
        %v429 = vadd.f32 %v333, %v428
        %v430 = vrot.slane %v429, 2
        %v431 = vadd.f32 %v429, %v430
        %v432 = vrot.slane %v431, 1
        %v433 = vadd.f32 %v431, %v432
        %v434 = vrot.slane %v335, 4
        %v435 = vadd.f32 %v335, %v434
        %v436 = vrot.slane %v435, 2
        %v437 = vadd.f32 %v435, %v436
        %v438 = vrot.slane %v437, 1
        %v439 = vadd.f32 %v437, %v438
        %v440 = vmul.f32 %v397, 0.0012755102
        %v441 = vmul.f32 %v403, 0.0012755102
        %v442 = vmul.f32 %v409, 0.0012755102
        %v443 = vmul.f32 %v415, 0.0012755102
        %v444 = vmul.f32 %v421, 0.0012755102
        %v445 = vmul.f32 %v427, 0.0012755102
        %v446 = vmul.f32 %v433, 0.0012755102
        %v447 = vmul.f32 %v439, 0.0012755102
        %v448 = vmul.f32 %v384, %v384
        %v449 = vmul.f32 %v385, %v385
        %v450 = vmul.f32 %v386, %v386
        %v451 = vmul.f32 %v387, %v387
        %v452 = vmul.f32 %v388, %v388
        %v453 = vmul.f32 %v389, %v389
        %v454 = vmul.f32 %v390, %v390
        %v455 = vmul.f32 %v391, %v391
        %v456 = vsub.f32 %v440, %v448
        %v457 = vsub.f32 %v441, %v449
        %v458 = vsub.f32 %v442, %v450
        %v459 = vsub.f32 %v443, %v451
        %v460 = vsub.f32 %v444, %v452
        %v461 = vsub.f32 %v445, %v453
        %v462 = vsub.f32 %v446, %v454
        %v463 = vsub.f32 %v447, %v455
        %v464 = vmax.f32 %v456, 0.0
        %v465 = vmax.f32 %v457, 0.0
        %v466 = vmax.f32 %v458, 0.0
        %v467 = vmax.f32 %v459, 0.0
        %v468 = vmax.f32 %v460, 0.0
        %v469 = vmax.f32 %v461, 0.0
        %v470 = vmax.f32 %v462, 0.0
        %v471 = vmax.f32 %v463, 0.0
        %v472 = vadd.f32 %v464, 1e-06
        %v473 = vadd.f32 %v465, 1e-06
        %v474 = vadd.f32 %v466, 1e-06
        %v475 = vadd.f32 %v467, 1e-06
        %v476 = vadd.f32 %v468, 1e-06
        %v477 = vadd.f32 %v469, 1e-06
        %v478 = vadd.f32 %v470, 1e-06
        %v479 = vadd.f32 %v471, 1e-06
        %v480 = vrsqrt.pop %v472
        %v481 = vrsqrt.pop %v473
        %v482 = vrsqrt.pop %v474
        %v483 = vrsqrt.pop %v475
        %v484 = vrsqrt.pop %v476
        %v485 = vrsqrt.pop %v477
        %v486 = vrsqrt.pop %v478
        %v487 = vrsqrt.pop %v479
        %v488 = vld [vmem:[%s242] sm:$0xff]
        %v489 = vlaneseq
        %v490 = vshrl.u32 %v489, 7
        %v491 = vsub.s32 0, %v490
        %v492 = vrot.slane %v488, %v491
        %494 = vbcast.lane.b32.xlu0 %v492, 256
        %v495 = vpop.permute.xlu0 %494
        %v496 = vlaneseq
        %v497 = vshrl.u32 %v496, 7
        %v498 = vsub.s32 1, %v497
        %v499 = vrot.slane %v488, %v498
        %501 = vbcast.lane.b32.xlu0 %v499, 256
        %v502 = vpop.permute.xlu0 %501
        %v503 = vlaneseq
        %v504 = vshrl.u32 %v503, 7
        %v505 = vsub.s32 2, %v504
        %v506 = vrot.slane %v488, %v505
        %508 = vbcast.lane.b32.xlu0 %v506, 256
        %v509 = vpop.permute.xlu0 %508
        %v510 = vlaneseq
        %v511 = vshrl.u32 %v510, 7
        %v512 = vsub.s32 3, %v511
        %v513 = vrot.slane %v488, %v512
        %515 = vbcast.lane.b32.xlu0 %v513, 256
        %v516 = vpop.permute.xlu0 %515
        %v517 = vlaneseq
        %v518 = vshrl.u32 %v517, 7
        %v519 = vsub.s32 4, %v518
        %v520 = vrot.slane %v488, %v519
        %522 = vbcast.lane.b32.xlu0 %v520, 256
        %v523 = vpop.permute.xlu0 %522
        %v524 = vlaneseq
        %v525 = vshrl.u32 %v524, 7
        %v526 = vsub.s32 5, %v525
        %v527 = vrot.slane %v488, %v526
        %529 = vbcast.lane.b32.xlu0 %v527, 256
        %v530 = vpop.permute.xlu0 %529
        %v531 = vlaneseq
        %v532 = vshrl.u32 %v531, 7
        %v533 = vsub.s32 6, %v532
        %v534 = vrot.slane %v488, %v533
        %536 = vbcast.lane.b32.xlu0 %v534, 256
        %v537 = vpop.permute.xlu0 %536
        %v538 = vlaneseq
        %v539 = vshrl.u32 %v538, 7
        %v540 = vsub.s32 7, %v539
        %v541 = vrot.slane %v488, %v540
        %543 = vbcast.lane.b32.xlu0 %v541, 256
        %v544 = vpop.permute.xlu0 %543
        %v545 = vld [vmem:[%s251] sm:$0xff]
        %v546 = vlaneseq
        %v547 = vshrl.u32 %v546, 7
        %v548 = vsub.s32 0, %v547
        %v549 = vrot.slane %v545, %v548
        %551 = vbcast.lane.b32.xlu0 %v549, 256
        %v552 = vpop.permute.xlu0 %551
        %v553 = vlaneseq
        %v554 = vshrl.u32 %v553, 7
        %v555 = vsub.s32 1, %v554
        %v556 = vrot.slane %v545, %v555
        %558 = vbcast.lane.b32.xlu0 %v556, 256
        %v559 = vpop.permute.xlu0 %558
        %v560 = vlaneseq
        %v561 = vshrl.u32 %v560, 7
        %v562 = vsub.s32 2, %v561
        %v563 = vrot.slane %v545, %v562
        %565 = vbcast.lane.b32.xlu0 %v563, 256
        %v566 = vpop.permute.xlu0 %565
        %v567 = vlaneseq
        %v568 = vshrl.u32 %v567, 7
        %v569 = vsub.s32 3, %v568
        %v570 = vrot.slane %v545, %v569
        %572 = vbcast.lane.b32.xlu0 %v570, 256
        %v573 = vpop.permute.xlu0 %572
        %v574 = vlaneseq
        %v575 = vshrl.u32 %v574, 7
        %v576 = vsub.s32 4, %v575
        %v577 = vrot.slane %v545, %v576
        %579 = vbcast.lane.b32.xlu0 %v577, 256
        %v580 = vpop.permute.xlu0 %579
        %v581 = vlaneseq
        %v582 = vshrl.u32 %v581, 7
        %v583 = vsub.s32 5, %v582
        %v584 = vrot.slane %v545, %v583
        %586 = vbcast.lane.b32.xlu0 %v584, 256
        %v587 = vpop.permute.xlu0 %586
        %v588 = vlaneseq
        %v589 = vshrl.u32 %v588, 7
        %v590 = vsub.s32 6, %v589
        %v591 = vrot.slane %v545, %v590
        %593 = vbcast.lane.b32.xlu0 %v591, 256
        %v594 = vpop.permute.xlu0 %593
        %v595 = vlaneseq
        %v596 = vshrl.u32 %v595, 7
        %v597 = vsub.s32 7, %v596
        %v598 = vrot.slane %v545, %v597
        %600 = vbcast.lane.b32.xlu0 %v598, 256
        %v601 = vpop.permute.xlu0 %600
        %v602 = vmul.f32 %v480, %v495
        %v603 = vmul.f32 %v481, %v502
        %v604 = vmul.f32 %v482, %v509
        %v605 = vmul.f32 %v483, %v516
        %v606 = vmul.f32 %v484, %v523
        %v607 = vmul.f32 %v485, %v530
        %v608 = vmul.f32 %v486, %v537
        %v609 = vmul.f32 %v487, %v544
        %v610 = vmul.f32 %v288, %v602
        %v611 = vmul.f32 %v289, %v603
        %v612 = vmul.f32 %v290, %v604
        %v613 = vmul.f32 %v291, %v605
        %v614 = vmul.f32 %v292, %v606
        %v615 = vmul.f32 %v293, %v607
        %v616 = vmul.f32 %v294, %v608
        %v617 = vmul.f32 %v295, %v609
        %v618 = vmul.f32 %v384, %v602
        %v619 = vmul.f32 %v385, %v603
        %v620 = vmul.f32 %v386, %v604
        %v621 = vmul.f32 %v387, %v605
        %v622 = vmul.f32 %v388, %v606
        %v623 = vmul.f32 %v389, %v607
        %v624 = vmul.f32 %v390, %v608
        %v625 = vmul.f32 %v391, %v609
        %v626 = vsub.f32 %v552, %v618
        %v627 = vsub.f32 %v559, %v619
        %v628 = vsub.f32 %v566, %v620
        %v629 = vsub.f32 %v573, %v621
        %v630 = vsub.f32 %v580, %v622
        %v631 = vsub.f32 %v587, %v623
        %v632 = vsub.f32 %v594, %v624
        %v633 = vsub.f32 %v601, %v625
        %v634 = vadd.f32 %v610, %v626
        %v635 = vadd.f32 %v611, %v627
        %v636 = vadd.f32 %v612, %v628
        %v637 = vadd.f32 %v613, %v629
        %v638 = vadd.f32 %v614, %v630
        %v639 = vadd.f32 %v615, %v631
        %v640 = vadd.f32 %v616, %v632
        %v641 = vadd.f32 %v617, %v633
        %642 = vst [vmem:[%s283] sm:$0xff] %v634
        %643 = vst [vmem:[%s283 + $0x8] sm:$0xff] %v635
        %644 = vst [vmem:[%s283 + $0x10] sm:$0xff] %v636
        %645 = vst [vmem:[%s283 + $0x18] sm:$0xff] %v637
        %646 = vst [vmem:[%s283 + $0x20] sm:$0xff] %v638
        %647 = vst [vmem:[%s283 + $0x28] sm:$0xff] %v639
        %648 = vst [vmem:[%s283 + $0x30] sm:$0xff] %v640
        %649 = vst [vmem:[%s283 + $0x38] sm:$0xff] %v641
        %s650 = sand.u32 %s129, 1
        %s651 = scalar_lea.sflag [#allocation4], %s650
        %s652 = sand.u32 %s129, 1
        %s653 = smul.addr %s652, 64
        %s654 = scalar_lea.vmem [#allocation8], %s653
        // Predicated region
        $region45: #{tpu_custom_call.1} parent=31 // pred_check
          %p655 = pneg %p139
        $region46: #{tpu_custom_call.1} parent=31 // pred_check_branch
          %657 = sbr.rel (%p655) target = $region48
        $region47: #{tpu_custom_call.1} parent=31 // pred_region
          %s658 = smul.u32 8, %s28
          %s660 = ssub.s32 1024, 1024
          %661 = vsyncadd %s651, %s660
          %s662 = smul.addr %s27, 8
          %s663 = sadd.s32 %s658, %s662
          %s664 = smul.addr %s663, 128
          %s665 = scalar_lea.hbm %s3, %s664
          %s666 = sshll.u32 %s654, 4
          %s667 = int_to_ptr.vmem [resolvable:$true] %s666
          %672 = dma.vmem_to_hbm [thread:$0]  %s667, 1024, %s665, %s651, 128, 128, 8
        $region48: #{tpu_custom_call.1} parent=31 // pred_fallthru
          _
      $region32: #{tpu_custom_call.1} parent=5 // pred_fallthru
        _
      %p673 = scmp.le.s32.totalorder 2, %s18
      // Predicated region
      $region49: #{tpu_custom_call.1} parent=5 // pred_check
        %p674 = pneg %p673
      $region50: #{tpu_custom_call.1} parent=5 // pred_check_branch
        %676 = sbr.rel (%p674) target = $region52
      $region51: #{tpu_custom_call.1} parent=5 // pred_region
        %s677 = ssub.s32 %s18, 2
        // Predicated region
        $region53: #{tpu_custom_call.1} parent=51 // pred_check
          %p678 = pneg %p145
        $region54: #{tpu_custom_call.1} parent=51 // pred_check_branch
          %680 = sbr.rel (%p678) target = $region56
        $region55: #{tpu_custom_call.1} parent=51 // pred_region
          %s681 = sand.u32 %s130, 1
          %s682 = scalar_lea.sflag [#allocation4], %s681
          %s683 = sand.u32 %s130, 1
          %s684 = smul.addr %s683, 64
          %s685 = scalar_lea.vmem [#allocation8], %s684
          %686 = dma.done %s682, 1024
        $region56: #{tpu_custom_call.1} parent=51 // pred_fallthru
          _
      $region52: #{tpu_custom_call.1} parent=5 // pred_fallthru
        _
    $region6: #{tpu_custom_call.1} parent=1 // loop_footer
      %s22 = sadd.s32 1, %s18
    $region7: #{tpu_custom_call.1} parent=1 // loop_footer_branch
      %17 = sbr.rel target = $region3
    $region8: #{tpu_custom_call.1} parent=1 // loop_exit
      _
    %687 = vsyncpa [#allocation3], 1
    %s688 = scalar_lea.sflag [#allocation3], 1
    %689 = vsyncpa %s688, 1
    %690 = vsyncpa [#allocation6], 1
    %s691 = scalar_lea.sflag [#allocation6], 1
    %692 = vsyncpa %s691, 1
    %693 = vsyncpa [#allocation4], 1
    %s694 = scalar_lea.sflag [#allocation4], 1
    %695 = vsyncpa %s694, 1

</llo_original>
